<compile_context>
chip_gen: v7x
topology: tpu7x:2x2x1
jax: 0.10.0
libtpu: 0.0.40
codegen_flags: <defaults>
</compile_context>

<pallas_src>
import functools

import jax
import jax.numpy as jnp
from jax.experimental import pallas as pl
from jax.experimental.pallas import tpu as pltpu


def _vmem_capacity_bytes(default=64 * 1024 * 1024):
    # Conservative (v7x-sized) fallback if the query is unavailable.
    try:
        return int(pltpu.get_tpu_info().vmem_capacity_bytes)
    except Exception:
        return default


def _dice_kernel(p_ref, g_ref, o_ref, *, hw_true, nc_true, tnc, mask_rows):
    # p_ref / g_ref: (tnc, hw) lane-dense tiles. hw equals the full H*W
    # (ragged lanes handled by Mosaic); the final NC block may be ragged, in
    # which case rows >= nc_true hold unspecified values and are masked below.
    p = p_ref[...].astype(jnp.float32)
    g = g_ref[...].astype(jnp.float32)

    s = p + g
    d = p - g
    sum_s = jnp.sum(s * s, axis=-1, keepdims=True)  # = sum(p^2 + 2pg + g^2), (tnc, 1)
    sum_d = jnp.sum(d * d, axis=-1, keepdims=True)  # = sum(p^2 - 2pg + g^2), (tnc, 1)

    # (mean(2pg) + eps) / (mean(p^2+g^2) + eps)
    #   == (sum_s - sum_d + 2*eps*HW) / (sum_s + sum_d + 2*eps*HW)
    eps2 = jnp.float32(2.0 * 1e-07 * hw_true)
    ratio = (sum_s - sum_d + eps2) / (sum_s + sum_d + eps2)  # (tnc, 1)

    if mask_rows:
        # Ragged final NC block: rows past nc_true are unspecified -> jnp.where
        # (not multiply) so NaN/Inf from garbage cannot poison the sum.
        blk = pl.program_id(0)
        row = jax.lax.broadcasted_iota(jnp.int32, (tnc, 1), 0) + blk * tnc
        ratio = jnp.where(row < nc_true, ratio, 0.0)

    # Per-block partial sum of dice ratios; final mean happens outside.
    o_ref[...] = jnp.sum(ratio).reshape(1, 1, 1)


def dice_loss(pred, gt):
    assert pred.shape == gt.shape
    n, c, h, w = pred.shape
    nc = n * c
    hw = h * w

    # Lane-dense (NC, H*W) view: pure reshape, no padding, no extra HBM traffic.
    pred_f = pred.reshape(nc, hw)
    gt_f = gt.reshape(nc, hw)

    itemsize = jnp.dtype(pred_f.dtype).itemsize
    sub = {4: 8, 2: 16, 1: 32}.get(itemsize, 8)  # dtype-aware sublane multiple

    # Generation-aware VMEM budget: ~62.5% of physical VMEM
    # (~40 MiB on v7x's 64 MiB, ~80 MiB on v5e/v6e's 128 MiB).
    vmem_cap = _vmem_capacity_bytes()
    usable = int(vmem_cap * 0.625)
    slack = 2 * 1024 * 1024

    # Per (n,c)-row VMEM cost: 2 inputs x 2 pipeline buffers in the input dtype
    # plus ~4 tile-sized f32 temporaries (upcasts and (p +/- g) squares).
    temps_f32 = 4
    per_row_bytes = 4 * hw * itemsize + temps_f32 * hw * 4
    max_rows = max(sub, ((usable - slack) // per_row_bytes) // sub * sub)
    # TODO(synk): for extreme H*W (minimum-row tile > VMEM budget) a second
    # grid axis / in-kernel HW chunking would be needed; not required here.

    if nc <= sub:
        tnc = nc  # block dim equals full array dim -> exempt from sublane rule
    else:
        # Cap at ~NC/2 (rounded up to the sublane multiple) so the "parallel"
        # grid has >= 2 steps and both v7x TensorCores get work.
        half = ((pl.cdiv(nc, 2) + sub - 1) // sub) * sub
        tnc = max(sub, min(max_rows, half))

    num_blocks = pl.cdiv(nc, tnc)
    mask_rows = (num_blocks * tnc != nc)

    needed = 4 * tnc * hw * itemsize + temps_f32 * tnc * hw * 4 + slack
    vmem_limit = int(min(int(vmem_cap * 0.9), max(needed, 16 * 1024 * 1024)))

    kernel = functools.partial(
        _dice_kernel, hw_true=hw, nc_true=nc, tnc=tnc, mask_rows=mask_rows
    )

    partials = pl.pallas_call(
        kernel,
        out_shape=jax.ShapeDtypeStruct((num_blocks, 1, 1), jnp.float32),
        grid_spec=pltpu.PrefetchScalarGridSpec(
            num_scalar_prefetch=0,
            grid=(num_blocks,),
            in_specs=[
                pl.BlockSpec((tnc, hw), lambda i: (i, 0)),
                pl.BlockSpec((tnc, hw), lambda i: (i, 0)),
            ],
            out_specs=pl.BlockSpec((1, 1, 1), lambda i: (i, 0, 0)),
        ),
        compiler_params=pltpu.CompilerParams(
            dimension_semantics=("parallel",),
            vmem_limit_bytes=vmem_limit,
        ),
    )(pred_f, gt_f)

    # Final mean over the true number of (n, c) planes (tiny scalar epilogue).
    return jnp.sum(partials) / nc


def _dice_loss_ref(pred, gt):
    pred = pred.astype(jnp.float32)
    gt = gt.astype(jnp.float32)
    intersection = jnp.mean(2.0 * pred * gt, axis=(-1, -2))
    union = jnp.mean(pred * pred + gt * gt, axis=(-1, -2))
    eps = 1e-07
    return jnp.mean((intersection + eps) / (union + eps))


if __name__ == "__main__":
    key = jax.random.PRNGKey(0)
    k1, k2 = jax.random.split(key)

    # Main case: (2, 4, 16, 16), f32 probabilities vs. binary masks.
    N, C, H, W = 2, 4, 16, 16
    pred = jax.nn.sigmoid(jax.random.normal(k1, (N, C, H, W), dtype=jnp.float32))
    gt = (jax.random.uniform(k2, (N, C, H, W)) > 0.5).astype(jnp.float32)

    out = dice_loss(pred, gt)
    jax.block_until_ready(out)
    ref = _dice_loss_ref(pred, gt)
    assert jnp.allclose(out, ref, atol=1e-5, rtol=1e-5), (out, ref)

    # bf16 inputs (halved HBM traffic); kernel accumulates in f32.
    out_bf = dice_loss(pred.astype(jnp.bfloat16), gt.astype(jnp.bfloat16))
    jax.block_until_ready(out_bf)
    ref_bf = _dice_loss_ref(pred.astype(jnp.bfloat16), gt.astype(jnp.bfloat16))
    assert jnp.allclose(out_bf, ref_bf, atol=1e-5, rtol=1e-5), (out_bf, ref_bf)

    # Unaligned case: H*W not a multiple of 128 and NC not a multiple of the
    # block rows — exercises the no-pad ragged-lane and ragged-row paths.
    k3, k4 = jax.random.split(k2)
    pred2 = jax.nn.sigmoid(jax.random.normal(k3, (3, 7, 10, 12), dtype=jnp.float32))
    gt2 = (jax.random.uniform(k4, (3, 7, 10, 12)) > 0.5).astype(jnp.float32)
    out2 = dice_loss(pred2, gt2)
    jax.block_until_ready(out2)
    ref2 = _dice_loss_ref(pred2, gt2)
    assert jnp.allclose(out2, ref2, atol=1e-5, rtol=1e-5), (out2, ref2)

    print("KERNEL_OK")
</pallas_src>

<mosaic_0001>
module attributes {stable_mosaic.version = 11 : i64} {
  func.func @_dice_kernel(%arg0: i32, %arg1: memref<8x256xf32, #tpu.memory_space<vmem>>, %arg2: memref<8x256xf32, #tpu.memory_space<vmem>>, %arg3: memref<1x1x1xf32, #tpu.memory_space<vmem>>) attributes {dimension_semantics = [#tpu.dimension_semantics<parallel>], iteration_bounds = array<i64: 1>, scalar_prefetch = 0 : i64, scratch_operands = 0 : i64, tpu.core_type = #tpu.core_type<tc>, window_params = [{transform_indices = @transform_0, window_bounds = array<i64: 8, 256>}, {transform_indices = @transform_1, window_bounds = array<i64: 8, 256>}, {transform_indices = @transform_2, window_bounds = array<i64: 1, 1, 1>}]} {
    %c0 = arith.constant 0 : index
    %c0_0 = arith.constant 0 : index
    %0 = vector.load %arg1[%c0, %c0_0] : memref<8x256xf32, #tpu.memory_space<vmem>>, vector<8x256xf32>
    %c0_1 = arith.constant 0 : index
    %c0_2 = arith.constant 0 : index
    %1 = vector.load %arg2[%c0_1, %c0_2] : memref<8x256xf32, #tpu.memory_space<vmem>>, vector<8x256xf32>
    %2 = arith.addf %0, %1 : vector<8x256xf32>
    %3 = arith.subf %0, %1 : vector<8x256xf32>
    %4 = arith.mulf %2, %2 : vector<8x256xf32>
    %cst = arith.constant dense<0.000000e+00> : vector<8xf32>
    %5 = vector.multi_reduction <add>, %4, %cst [1] : vector<8x256xf32> to vector<8xf32>
    %6 = vector.shape_cast %5 : vector<8xf32> to vector<8x1xf32>
    %7 = arith.mulf %3, %3 : vector<8x256xf32>
    %cst_3 = arith.constant dense<0.000000e+00> : vector<8xf32>
    %8 = vector.multi_reduction <add>, %7, %cst_3 [1] : vector<8x256xf32> to vector<8xf32>
    %9 = vector.shape_cast %8 : vector<8xf32> to vector<8x1xf32>
    %10 = arith.subf %6, %9 : vector<8x1xf32>
    %cst_4 = arith.constant 5.120000e-05 : f32
    %11 = vector.broadcast %cst_4 : f32 to vector<8x1xf32>
    %12 = arith.addf %10, %11 : vector<8x1xf32>
    %13 = arith.addf %6, %9 : vector<8x1xf32>
    %cst_5 = arith.constant 5.120000e-05 : f32
    %14 = vector.broadcast %cst_5 : f32 to vector<8x1xf32>
    %15 = arith.addf %13, %14 : vector<8x1xf32>
    %16 = arith.divf %12, %15 : vector<8x1xf32>
    %17 = vector.shape_cast %16 : vector<8x1xf32> to vector<1x8x1xf32>
    %cst_6 = arith.constant dense<0.000000e+00> : vector<1xf32>
    %18 = vector.multi_reduction <add>, %17, %cst_6 [1, 2] : vector<1x8x1xf32> to vector<1xf32>
    %19 = vector.shape_cast %18 : vector<1xf32> to vector<1x1x1xf32>
    %20 = vector.extract %19[0, 0, 0] : f32 from vector<1x1x1xf32>
    %21 = vector.broadcast %20 : f32 to vector<1x1x1xf32>
    %c0_7 = arith.constant 0 : index
    %c0_8 = arith.constant 0 : index
    %c0_9 = arith.constant 0 : index
    %22 = vector.load %arg3[%c0_7, %c0_8, %c0_9] : memref<1x1x1xf32, #tpu.memory_space<vmem>>, vector<1x1x1xf32>
    tpu.vector_store %arg3[%c0_7, %c0_8, %c0_9], %21 {strides = array<i32>} : memref<1x1x1xf32, #tpu.memory_space<vmem>>, vector<1x1x1xf32>,
    return
  }
  func.func @transform_0(%arg0: i32) -> (i32, i32) {
    %c0_i32 = arith.constant 0 : i32
    %c0_i32_0 = arith.constant 0 : i32
    return %arg0, %c0_i32 : i32, i32
  }
  func.func @transform_1(%arg0: i32) -> (i32, i32) {
    %c0_i32 = arith.constant 0 : i32
    %c0_i32_0 = arith.constant 0 : i32
    return %arg0, %c0_i32 : i32, i32
  }
  func.func @transform_2(%arg0: i32) -> (i32, i32, i32) {
    %c0_i32 = arith.constant 0 : i32
    %c0_i32_0 = arith.constant 0 : i32
    %c0_i32_1 = arith.constant 0 : i32
    return %arg0, %c0_i32, %c0_i32_0 : i32, i32, i32
  }
}

</mosaic_0001>

<llo_original>
// kernel: tpu_custom_call.1
$region0: #{tpu_custom_call.1}
  #allocation0 [shape = 'u32[]', space=smem, size = 0x4, offset = 0x4, fixed_abs, tag = 'smem constant byte address 0x4 - core index']
  #allocation1 [shape = 'u32[144,128]{1,0:T(1,128)}', space=vmem, size = 0x12000, scoped, tag = 'internal scratch']
  %s0 = inlined_call_operand.hbm [shape: f32[8,256], index: 0, kind: input, shape index: {}]
  %s1 = inlined_call_operand.hbm [shape: f32[8,256], index: 1, kind: input, shape index: {}]
  %s2 = inlined_call_operand.hbm [shape: f32[1,1,1], index: 2, kind: output, shape index: {}]
  %s3 = sld [smem:[#allocation0]]
  $region26: #{tpu_custom_call.1} parent=0
    _
  %s5 = ssub.s32 1, %s3
  %s6 = scalar_select 0, %s5, %s3
  $region1: #{tpu_custom_call.1} parent=0
    #allocation2 [shape = 'u8[8192]{0}', space=vmem, size = 0x2000, scoped, tag = 'input window, operand 0, single buffered']
    #allocation3 [shape = 's32[1]{0}', space=sflag, size = 0x4, scoped, tag = 'scoped memory for tpu_custom_call.1']
    #allocation4 [shape = 's32[1]{0}', space=sflag, size = 0x4, scoped, tag = 'scoped memory for tpu_custom_call.1']
    #allocation5 [shape = 'u8[8192]{0}', space=vmem, size = 0x2000, scoped, tag = 'input window, operand 1, single buffered']
    #allocation6 [shape = 's32[1]{0}', space=sflag, size = 0x4, scoped, tag = 'scoped memory for tpu_custom_call.1']
    #allocation7 [shape = 'u8[512]{0}', space=vmem, size = 0x400, scoped, tag = 'output window, operand 0, single buffered']
    %7 = vsyncpa [#allocation3], 0
    %8 = vsyncpa [#allocation6], 0
    %9 = vsyncpa [#allocation4], 0
    // Predicated region
    $region2: #{tpu_custom_call.1} parent=1 // pred_check
      _
    $region3: #{tpu_custom_call.1} parent=1 // pred_check_branch
      %11 = sbr.rel (0) target = $region5
    $region4: #{tpu_custom_call.1} parent=1 // pred_region
      %s13 = ssub.s32 256, 256
      %14 = vsyncadd [#allocation3], %s13
      %s16 = sshll.u32 [#allocation2], 4
      %s17 = int_to_ptr.vmem [resolvable:$true] %s16
      %19 = dma.hbm_to_vmem [thread:$0]  %s0, 256, %s17, [#allocation3]
    $region5: #{tpu_custom_call.1} parent=1 // pred_fallthru
      _
    // Predicated region
    $region6: #{tpu_custom_call.1} parent=1 // pred_check
      _
    $region7: #{tpu_custom_call.1} parent=1 // pred_check_branch
      %21 = sbr.rel (0) target = $region9
    $region8: #{tpu_custom_call.1} parent=1 // pred_region
      %s23 = ssub.s32 256, 256
      %24 = vsyncadd [#allocation6], %s23
      %s26 = sshll.u32 [#allocation5], 4
      %s27 = int_to_ptr.vmem [resolvable:$true] %s26
      %29 = dma.hbm_to_vmem [thread:$0]  %s1, 256, %s27, [#allocation6]
    $region9: #{tpu_custom_call.1} parent=1 // pred_fallthru
      _
    // Predicated region
    $region10: #{tpu_custom_call.1} parent=1 // pred_check
      _
    $region11: #{tpu_custom_call.1} parent=1 // pred_check_branch
      %31 = sbr.rel (0) target = $region13
    $region12: #{tpu_custom_call.1} parent=1 // pred_region
      %32 = dma.done [#allocation3], 256
    $region13: #{tpu_custom_call.1} parent=1 // pred_fallthru
      _
    // Predicated region
    $region14: #{tpu_custom_call.1} parent=1 // pred_check
      _
    $region15: #{tpu_custom_call.1} parent=1 // pred_check_branch
      %34 = sbr.rel (0) target = $region17
    $region16: #{tpu_custom_call.1} parent=1 // pred_region
      %35 = dma.done [#allocation6], 256
    $region17: #{tpu_custom_call.1} parent=1 // pred_fallthru
      _
    %v36 = vld [vmem:[#allocation2] sm:$0xff]
    %v37 = vld [vmem:[#allocation2 + $0x8] sm:$0xff]
    %v38 = vld [vmem:[#allocation5] sm:$0xff]
    %v39 = vld [vmem:[#allocation5 + $0x8] sm:$0xff]
    %v40 = vadd.f32 %v36, %v38
    %v41 = vadd.f32 %v37, %v39
    %v42 = vsub.f32 %v36, %v38
    %v43 = vsub.f32 %v37, %v39
    %v44 = vmul.f32 %v40, %v40
    %v45 = vmul.f32 %v41, %v41
    %v46 = vadd.f32 %v44, %v45
    %47 = vadd.xlane.f32.xlu0 %v46
    %v48 = vpop.xlane.xlu0 %47
    %v49 = vmul.f32 %v42, %v42
    %v50 = vmul.f32 %v43, %v43
    %v51 = vadd.f32 %v49, %v50
    %52 = vadd.xlane.f32.xlu0 %v51
    %v53 = vpop.xlane.xlu0 %52
    %v54 = vsub.f32 %v48, %v53
    %v55 = vadd.f32 %v54, 5.12e-05
    %v56 = vadd.f32 %v48, %v53
    %v57 = vadd.f32 %v56, 5.12e-05
    %v58 = vrcp.pop %v57
    %v59 = vmul.f32 %v55, %v58
    %vm60 = vcmask 7168
    %v61 = vsel %vm60, %v59, 0.0
    %62 = vadd.xlane.f32.xlu0 %v61
    %v63 = vpop.xlane.xlu0 %62
    %v64 = vrot.slane %v63, 4
    %v65 = vadd.f32 %v63, %v64
    %v66 = vrot.slane %v65, 2
    %v67 = vadd.f32 %v65, %v66
    %v68 = vrot.slane %v67, 1
    %v69 = vadd.f32 %v67, %v68
    %s70 = vtos %v69
    %v71 = vstv %s70
    %vm72 = vcmask 0
    %73 = vst.msk [vmem:[#allocation7] sm:$0x1] %vm72, %v71
    // Predicated region
    $region18: #{tpu_custom_call.1} parent=1 // pred_check
      _
    $region19: #{tpu_custom_call.1} parent=1 // pred_check_branch
      %75 = sbr.rel (0) target = $region21
    $region20: #{tpu_custom_call.1} parent=1 // pred_region
      %s77 = ssub.s32 16, 16
      %78 = vsyncadd [#allocation4], %s77
      %s80 = sshll.u32 [#allocation7], 4
      %s81 = int_to_ptr.vmem [resolvable:$true] %s80
      %83 = dma.vmem_to_hbm [thread:$0]  %s81, 16, %s2, [#allocation4]
    $region21: #{tpu_custom_call.1} parent=1 // pred_fallthru
      _
    // Predicated region
    $region22: #{tpu_custom_call.1} parent=1 // pred_check
      _
    $region23: #{tpu_custom_call.1} parent=1 // pred_check_branch
      %85 = sbr.rel (0) target = $region25
    $region24: #{tpu_custom_call.1} parent=1 // pred_region
      %86 = dma.done [#allocation4], 16
    $region25: #{tpu_custom_call.1} parent=1 // pred_fallthru
      _
    %87 = vsyncpa [#allocation3], 1
    %88 = vsyncpa [#allocation6], 1
    %89 = vsyncpa [#allocation4], 1

</llo_original>
